<compile_context>
chip_gen: v6e
topology: v6e:2x2x1
jax: 0.10.0
libtpu: 0.0.40
codegen_flags: <defaults>
</compile_context>

<pallas_src>
import functools
import math

import jax
import jax.numpy as jnp
from jax.experimental import pallas as pl
from jax.experimental.pallas import tpu as pltpu


def _rmsnorm_kernel(x_ref, g_ref, o_ref, *, eps, hidden):
    x = x_ref[...].astype(jnp.float32)            # (tile_rows, hidden_pad)
    g = g_ref[...]                                # (1, hidden_pad), already f32
    # Zero-padded lanes contribute 0 to the sum of squares; divide by the
    # ORIGINAL hidden so the mean matches the un-padded reference.
    ssq = jnp.sum(x * x, axis=-1, keepdims=True)  # (tile_rows, 1)
    rms = jnp.sqrt(ssq * (1.0 / hidden))
    # One reciprocal per row (approx=False keeps full precision vs. the
    # reference's exact divide), then only multiplies on the VPU.
    inv = pl.reciprocal(rms + eps, approx=False)
    o_ref[...] = (x * inv * g).astype(o_ref.dtype)


def _round_up(n, m):
    return ((n + m - 1) // m) * m


def rmsnorm_pallas(x, gamma, eps=1e-8, tile_rows=None,
                   vmem_limit_bytes=32 * 1024 * 1024):
    """x: (..., hidden), gamma: (hidden,). Normalizes over the last axis."""
    orig_shape = x.shape
    hidden = orig_shape[-1]
    rows = int(math.prod(orig_shape[:-1]))  # 1 for 1-D inputs
    x2 = x.reshape(rows, hidden)
    g2 = gamma.reshape(1, hidden).astype(jnp.float32)

    # Lane-dense hidden axis: pad to a multiple of 128.
    hidden_pad = _round_up(hidden, 128)
    if hidden_pad != hidden:
        x2 = jnp.pad(x2, ((0, 0), (0, hidden_pad - hidden)))
        g2 = jnp.pad(g2, ((0, 0), (0, hidden_pad - hidden)))

    # Sublane packing: f32 -> 8 rows, bf16/f16 -> 16, int8/fp8 -> 32.
    itemsize = jnp.dtype(x.dtype).itemsize
    sublane = {4: 8, 2: 16, 1: 32}.get(itemsize, 8)

    if tile_rows is None:
        # Biggest tile that keeps double-buffered in+out well under the scoped
        # VMEM budget on every generation: aim for ~2 MiB per x tile
        # (=> ~8-10 MiB total with double buffering + f32 temps).
        target_tile_bytes = 2 * 1024 * 1024
        tile_rows = max(sublane, target_tile_bytes // (hidden_pad * itemsize))
        tile_rows = min(tile_rows, 1024)

    tile_rows = max(sublane, (tile_rows // sublane) * sublane)
    # Don't make a tile bigger than the (row-padded) input.
    tile_rows = min(tile_rows, _round_up(rows, sublane))
    # Keep at least 2 grid steps when there is enough work so the parallel
    # grid axis can be split across v7x's two TensorCores.
    if rows >= 2 * sublane:
        half_rows = -(-rows // 2)
        tile_rows = min(tile_rows, _round_up(half_rows, sublane))

    rows_pad = _round_up(rows, tile_rows)
    if rows_pad != rows:
        # Zero rows give rms=0 -> 0/(0+eps)=0, no NaNs; sliced off below.
        x2 = jnp.pad(x2, ((0, rows_pad - rows), (0, 0)))

    grid = (rows_pad // tile_rows,)
    kernel = functools.partial(_rmsnorm_kernel, eps=eps, hidden=hidden)

    out = pl.pallas_call(
        kernel,
        out_shape=jax.ShapeDtypeStruct((rows_pad, hidden_pad), x.dtype),
        grid_spec=pltpu.PrefetchScalarGridSpec(
            num_scalar_prefetch=0,
            grid=grid,
            in_specs=[
                pl.BlockSpec((tile_rows, hidden_pad), lambda i: (i, 0)),
                pl.BlockSpec((1, hidden_pad), lambda i: (0, 0)),
            ],
            out_specs=pl.BlockSpec((tile_rows, hidden_pad), lambda i: (i, 0)),
        ),
        compiler_params=pltpu.CompilerParams(
            dimension_semantics=("parallel",),
            vmem_limit_bytes=vmem_limit_bytes,
        ),
    )(x2, g2)

    out = out[:rows, :hidden]
    return out.reshape(orig_shape)


def rmsnorm_ref(x, gamma, eps=1e-8):
    rms = jnp.sqrt(jnp.mean(x.astype(jnp.float32) ** 2, axis=-1, keepdims=True))
    x_norm = x / (rms + eps)
    return gamma * x_norm


if __name__ == "__main__":
    key = jax.random.PRNGKey(0)
    batch, seq, hidden = 2, 8, 32
    x = jax.random.normal(key, (batch, seq, hidden), dtype=jnp.float32)
    # Parameter initialized deterministically as in nn.Module.__init__: ones.
    gamma = jnp.ones((hidden,), dtype=jnp.float32)

    out = rmsnorm_pallas(x, gamma, eps=1e-8)
    out = jax.block_until_ready(out)

    ref = rmsnorm_ref(x, gamma, eps=1e-8)
    assert out.shape == x.shape
    assert jnp.allclose(out, ref, atol=1e-5, rtol=1e-5), "mismatch vs reference"
    print("KERNEL_OK")
</pallas_src>

<mosaic_0001>
module attributes {stable_mosaic.version = 11 : i64} {
  func.func @_rmsnorm_kernel(%arg0: i32, %arg1: memref<8x128xf32, #tpu.memory_space<vmem>>, %arg2: memref<1x128xf32, #tpu.memory_space<vmem>>, %arg3: memref<8x128xf32, #tpu.memory_space<vmem>>) attributes {dimension_semantics = [#tpu.dimension_semantics<parallel>], iteration_bounds = array<i64: 2>, scalar_prefetch = 0 : i64, scratch_operands = 0 : i64, tpu.core_type = #tpu.core_type<tc>, window_params = [{transform_indices = @transform_0, window_bounds = array<i64: 8, 128>}, {pipeline_mode = #tpu.pipeline_mode<synchronous>, transform_indices = @transform_1, window_bounds = array<i64: 1, 128>}, {transform_indices = @transform_2, window_bounds = array<i64: 8, 128>}]} {
    %c0 = arith.constant 0 : index
    %c0_0 = arith.constant 0 : index
    %0 = vector.load %arg1[%c0, %c0_0] : memref<8x128xf32, #tpu.memory_space<vmem>>, vector<8x128xf32>
    %c0_1 = arith.constant 0 : index
    %c0_2 = arith.constant 0 : index
    %1 = vector.load %arg2[%c0_1, %c0_2] : memref<1x128xf32, #tpu.memory_space<vmem>>, vector<1x128xf32>
    %2 = arith.mulf %0, %0 : vector<8x128xf32>
    %cst = arith.constant dense<0.000000e+00> : vector<8xf32>
    %3 = vector.multi_reduction <add>, %2, %cst [1] : vector<8x128xf32> to vector<8xf32>
    %4 = vector.shape_cast %3 : vector<8xf32> to vector<8x1xf32>
    %cst_3 = arith.constant 3.125000e-02 : f32
    %5 = vector.broadcast %cst_3 : f32 to vector<8x1xf32>
    %6 = arith.mulf %4, %5 : vector<8x1xf32>
    %7 = math.sqrt %6 : vector<8x1xf32>
    %cst_4 = arith.constant 9.99999993E-9 : f32
    %8 = vector.broadcast %cst_4 : f32 to vector<8x1xf32>
    %9 = arith.addf %7, %8 : vector<8x1xf32>
    %10 = tpu.reciprocal %9 : vector<8x1xf32> -> vector<8x1xf32>
    %11 = vector.broadcast %10 : vector<8x1xf32> to vector<8x128xf32>
    %12 = arith.mulf %0, %11 : vector<8x128xf32>
    %13 = vector.broadcast %1 : vector<1x128xf32> to vector<8x128xf32>
    %14 = arith.mulf %12, %13 : vector<8x128xf32>
    %c0_5 = arith.constant 0 : index
    %c0_6 = arith.constant 0 : index
    %15 = vector.load %arg3[%c0_5, %c0_6] : memref<8x128xf32, #tpu.memory_space<vmem>>, vector<8x128xf32>
    tpu.vector_store %arg3[%c0_5, %c0_6], %14 {strides = array<i32>} : memref<8x128xf32, #tpu.memory_space<vmem>>, vector<8x128xf32>,
    return
  }
  func.func @transform_0(%arg0: i32) -> (i32, i32) {
    %c0_i32 = arith.constant 0 : i32
    %c0_i32_0 = arith.constant 0 : i32
    return %arg0, %c0_i32 : i32, i32
  }
  func.func @transform_1(%arg0: i32) -> (i32, i32) {
    %c0_i32 = arith.constant 0 : i32
    %c0_i32_0 = arith.constant 0 : i32
    %c0_i32_1 = arith.constant 0 : i32
    return %c0_i32, %c0_i32_0 : i32, i32
  }
  func.func @transform_2(%arg0: i32) -> (i32, i32) {
    %c0_i32 = arith.constant 0 : i32
    %c0_i32_0 = arith.constant 0 : i32
    return %arg0, %c0_i32 : i32, i32
  }
}

</mosaic_0001>

<llo_original>
// kernel: tpu_custom_call.1
$region0: #{tpu_custom_call.1}
  #allocation0 [shape = 'u32[]', space=smem, size = 0x4, offset = 0x4, fixed_abs, tag = 'smem constant byte address 0x4 - core index']
  #allocation1 [shape = 'u32[144,128]{1,0:T(1,128)}', space=vmem, size = 0x12000, scoped, tag = 'internal scratch']
  %s0 = inlined_call_operand.hbm [shape: f32[16,128], index: 0, kind: input, shape index: {}]
  %s1 = inlined_call_operand.vmem [shape: f32[1,128], index: 1, kind: input, shape index: {}]
  %s2 = inlined_call_operand.hbm [shape: f32[16,128], index: 2, kind: output, shape index: {}]
  %s3 = sld [smem:[#allocation0]]
  $region45: #{tpu_custom_call.1} parent=0
    _
  %s5 = ssub.s32 1, %s3
  %s6 = scalar_select 0, %s5, %s3
  $region1: #{tpu_custom_call.1} parent=0
    #allocation2 [shape = 'u8[8192]{0}', space=vmem, size = 0x2000, scoped, tag = 'input window, operand 0']
    #allocation3 [shape = 's32[2]{0}', space=sflag, size = 0x8, scoped, tag = 'scoped memory for tpu_custom_call.1']
    #allocation4 [shape = 's32[2]{0}', space=sflag, size = 0x8, scoped, tag = 'scoped memory for tpu_custom_call.1']
    #allocation5 [shape = 'u8[8192]{0}', space=vmem, size = 0x2000, scoped, tag = 'output window, operand 0']
    %7 = vsyncpa [#allocation3], 0
    %s8 = scalar_lea.sflag [#allocation3], 1
    %9 = vsyncpa %s8, 0
    %10 = vsyncpa [#allocation4], 0
    %s11 = scalar_lea.sflag [#allocation4], 1
    %12 = vsyncpa %s11, 0
    loop: start=0, step=1, limit=4
    $region2: #{tpu_custom_call.1} parent=1 // loop_pre_header
      _
    $region3: #{tpu_custom_call.1} parent=1 // loop_header
      %s14 = sphi 0, %s18
      %p15 = scmp.ge.s32.totalorder %s14, 4
      %s24 = sphi 0, %s26
      %s27 = sphi 0, %s24
      %s28 = sphi 0, %s27
      %s44 = sphi 0, %s28
      %s48 = sphi 0, %s48
      %s50 = sphi 0, %s48
      %s51 = sphi 0, %s50
      %s65 = sphi 0, %s51
      %s71 = sphi 0, %s73
      %s74 = sphi 0, %s71
      %s75 = sphi 0, %s74
      %s91 = sphi 0, %s75
    $region4: #{tpu_custom_call.1} parent=1 // loop_header_branch
      %17 = sbr.rel (%p15) target = $region8
    $region5: #{tpu_custom_call.1} parent=1 // loop_body
      %s19 = ssub.s32 %s14, 1
      %s20 = ssub.s32 %s14, 2
      %s21 = sadd.s32 %s14, 1
      %s22 = ssub.s32 %s14, %s21
      %p23 = scmp.eq.s32.totalorder %s22, 0
      %s25 = sadd.s32 %s24, 1
      %s26 = scalar_select %p23, %s24, %s25
      %p29 = pneg %p23
      %p30 = scmp.eq.s32.totalorder %s14, 1
      %p31 = por %p29, %p30
      %p32 = scmp.ne.s32.totalorder %s24, %s27
      %p33 = scmp.eq.s32.totalorder %s14, 0
      %p34 = por %p32, %p33
      %p35 = scmp.ne.s32.totalorder %s24, %s27
      %p36 = scmp.eq.s32.totalorder %s19, 1
      %p37 = por %p35, %p36
      %p38 = scmp.ne.s32.totalorder %s27, %s28
      %p39 = scmp.eq.s32.totalorder %s19, 0
      %p40 = por %p38, %p39
      %p41 = scmp.ne.s32.totalorder %s27, %s28
      %p42 = scmp.eq.s32.totalorder %s20, 1
      %p43 = por %p41, %p42
      %p45 = scmp.ne.s32.totalorder %s28, %s44
      %p46 = scmp.eq.s32.totalorder %s20, 0
      %p47 = por %p45, %p46
      %s49 = sadd.s32 %s48, 1
      %p52 = scmp.eq.s32.totalorder %s14, 1
      %p53 = scmp.ne.s32.totalorder %s48, %s50
      %p54 = scmp.eq.s32.totalorder %s14, 0
      %p55 = por %p53, %p54
      %p56 = scmp.ne.s32.totalorder %s48, %s50
      %p57 = scmp.eq.s32.totalorder %s19, 1
      %p58 = por %p56, %p57
      %p59 = scmp.ne.s32.totalorder %s50, %s51
      %p60 = scmp.eq.s32.totalorder %s19, 0
      %p61 = por %p59, %p60
      %p62 = scmp.ne.s32.totalorder %s50, %s51
      %p63 = scmp.eq.s32.totalorder %s20, 1
      %p64 = por %p62, %p63
      %p66 = scmp.ne.s32.totalorder %s51, %s65
      %p67 = scmp.eq.s32.totalorder %s20, 0
      %p68 = por %p66, %p67
      %s69 = ssub.s32 %s14, %s21
      %p70 = scmp.eq.s32.totalorder %s69, 0
      %s72 = sadd.s32 %s71, 1
      %s73 = scalar_select %p70, %s71, %s72
      %p76 = pneg %p70
      %p77 = scmp.eq.s32.totalorder %s14, 1
      %p78 = por %p76, %p77
      %p79 = scmp.ne.s32.totalorder %s71, %s74
      %p80 = scmp.eq.s32.totalorder %s14, 0
      %p81 = por %p79, %p80
      %p82 = scmp.ne.s32.totalorder %s71, %s74
      %p83 = scmp.eq.s32.totalorder %s19, 1
      %p84 = por %p82, %p83
      %p85 = scmp.ne.s32.totalorder %s74, %s75
      %p86 = scmp.eq.s32.totalorder %s19, 0
      %p87 = por %p85, %p86
      %p88 = scmp.ne.s32.totalorder %s74, %s75
      %p89 = scmp.eq.s32.totalorder %s20, 1
      %p90 = por %p88, %p89
      %p92 = scmp.ne.s32.totalorder %s75, %s91
      %p93 = scmp.eq.s32.totalorder %s20, 0
      %p94 = por %p92, %p93
      %p95 = scmp.le.s32.totalorder 1, %s14
      %p96 = scmp.lt.s32.totalorder %s14, 3
      %p97 = pnand %p95, %p96
      %p98 = pneg %p97
      // Predicated region
      $region9: #{tpu_custom_call.1} parent=5 // pred_check
        _
      $region10: #{tpu_custom_call.1} parent=5 // pred_check_branch
        %100 = sbr.rel (%p97) target = $region12
      $region11: #{tpu_custom_call.1} parent=5 // pred_region
        %s101 = ssub.s32 %s14, 1
        // Predicated region
        $region13: #{tpu_custom_call.1} parent=11 // pred_check
          %p102 = pneg %p61
        $region14: #{tpu_custom_call.1} parent=11 // pred_check_branch
          %104 = sbr.rel (%p102) target = $region16
        $region15: #{tpu_custom_call.1} parent=11 // pred_region
          _
        $region16: #{tpu_custom_call.1} parent=11 // pred_fallthru
          _
      $region12: #{tpu_custom_call.1} parent=5 // pred_fallthru
        _
      %p105 = scmp.lt.s32.totalorder %s14, 2
      // Predicated region
      $region17: #{tpu_custom_call.1} parent=5 // pred_check
        %p106 = pneg %p105
      $region18: #{tpu_custom_call.1} parent=5 // pred_check_branch
        %108 = sbr.rel (%p106) target = $region20
      $region19: #{tpu_custom_call.1} parent=5 // pred_region
        // Predicated region
        $region21: #{tpu_custom_call.1} parent=19 // pred_check
          %p109 = pneg %p34
        $region22: #{tpu_custom_call.1} parent=19 // pred_check_branch
          %111 = sbr.rel (%p109) target = $region24
        $region23: #{tpu_custom_call.1} parent=19 // pred_region
          %s112 = sand.u32 %s24, 1
          %s113 = scalar_lea.sflag [#allocation3], %s112
          %s114 = sand.u32 %s24, 1
          %s115 = smul.addr %s114, 8
          %s116 = scalar_lea.vmem [#allocation2], %s115
          %s118 = ssub.s32 128, 128
          %119 = vsyncadd %s113, %s118
          %s120 = smul.addr %s14, 128
          %s121 = scalar_lea.hbm %s0, %s120
          %s123 = sshll.u32 %s116, 4
          %s124 = int_to_ptr.vmem [resolvable:$true] %s123
          %126 = dma.hbm_to_vmem [thread:$0]  %s121, 128, %s124, %s113
        $region24: #{tpu_custom_call.1} parent=19 // pred_fallthru
          _
      $region20: #{tpu_custom_call.1} parent=5 // pred_fallthru
        _
      %p127 = scmp.le.s32.totalorder 1, %s14
      %p128 = scmp.lt.s32.totalorder %s14, 3
      %p129 = pnand %p127, %p128
      %p130 = pneg %p129
      // Predicated region
      $region25: #{tpu_custom_call.1} parent=5 // pred_check
        _
      $region26: #{tpu_custom_call.1} parent=5 // pred_check_branch
        %132 = sbr.rel (%p129) target = $region28
      $region27: #{tpu_custom_call.1} parent=5 // pred_region
        %s133 = ssub.s32 %s14, 1
        %s134 = sand.u32 %s27, 1
        %s135 = scalar_lea.sflag [#allocation3], %s134
        %s136 = sand.u32 %s27, 1
        %s137 = smul.addr %s136, 8
        %s138 = scalar_lea.vmem [#allocation2], %s137
        // Predicated region
        $region29: #{tpu_custom_call.1} parent=27 // pred_check
          %p139 = pneg %p40
        $region30: #{tpu_custom_call.1} parent=27 // pred_check_branch
          %141 = sbr.rel (%p139) target = $region32
        $region31: #{tpu_custom_call.1} parent=27 // pred_region
          %142 = dma.done %s135, 128
        $region32: #{tpu_custom_call.1} parent=27 // pred_fallthru
          _
        %s143 = sand.u32 %s27, 1
        %s144 = scalar_lea.sflag [#allocation3], %s143
        %s145 = sand.u32 %s27, 1
        %s146 = smul.addr %s145, 8
        %s147 = scalar_lea.vmem [#allocation2], %s146
        %p148 = pneg %p40
        %p149 = pneg %p37
        %p150 = pneg %p61
        %p151 = pneg %p58
        %p152 = pneg %p87
        %p153 = pneg %p84
        %s154 = sand.u32 %s74, 1
        %s155 = scalar_lea.sflag [#allocation4], %s154
        %s156 = sand.u32 %s74, 1
        %s157 = smul.addr %s156, 8
        %s158 = scalar_lea.vmem [#allocation5], %s157
        %v159 = vld [vmem:[%s138] sm:$0xff]
        %v160 = vld [vmem:[%s1] sm:$0x1]
        %v161 = vmul.f32 %v159, %v159
        %162 = vadd.xlane.f32.xlu0 %v161
        %v163 = vpop.xlane.xlu0 %162
        %v164 = vmul.f32 %v163, 0.03125
        %v165 = vrsqrt.pop %v164
        %v166 = vmul.f32 %v164, %v165
        %vm167 = vcmp.eq.f32.partialorder %v164, inf
        %v168 = vsel %vm167, %v164, %v166
        %vm169 = vcmp.eq.f32.partialorder %v164, 0.0
        %v170 = vand.u32 %v164, 2147483648
        %v171 = vsel %vm169, %v170, %v168
        %v172 = vadd.f32 %v171, 1e-08
        %v173 = vrcp.pop %v172
        %v174 = vmul.f32 %v159, %v173
        %v176 = vlaneseq
        %v177 = vshrl.u32 %v176, 7
        %v178 = vsub.s32 0, %v177
        %v179 = vrot.slane %v160, %v178
        %v181 = vmul.f32 %v174, %v179
        %182 = vst [vmem:[%s158] sm:$0xff] %v181
        %s183 = sand.u32 %s74, 1
        %s184 = scalar_lea.sflag [#allocation4], %s183
        %s185 = sand.u32 %s74, 1
        %s186 = smul.addr %s185, 8
        %s187 = scalar_lea.vmem [#allocation5], %s186
        // Predicated region
        $region33: #{tpu_custom_call.1} parent=27 // pred_check
          %p188 = pneg %p84
        $region34: #{tpu_custom_call.1} parent=27 // pred_check_branch
          %190 = sbr.rel (%p188) target = $region36
        $region35: #{tpu_custom_call.1} parent=27 // pred_region
          %s192 = ssub.s32 128, 128
          %193 = vsyncadd %s184, %s192
          %s194 = smul.addr %s19, 128
          %s195 = scalar_lea.hbm %s2, %s194
          %s197 = sshll.u32 %s187, 4
          %s198 = int_to_ptr.vmem [resolvable:$true] %s197
          %200 = dma.vmem_to_hbm [thread:$0]  %s198, 128, %s195, %s184
        $region36: #{tpu_custom_call.1} parent=27 // pred_fallthru
          _
      $region28: #{tpu_custom_call.1} parent=5 // pred_fallthru
        _
      %p201 = scmp.le.s32.totalorder 2, %s14
      // Predicated region
      $region37: #{tpu_custom_call.1} parent=5 // pred_check
        %p202 = pneg %p201
      $region38: #{tpu_custom_call.1} parent=5 // pred_check_branch
        %204 = sbr.rel (%p202) target = $region40
      $region39: #{tpu_custom_call.1} parent=5 // pred_region
        %s205 = ssub.s32 %s14, 2
        // Predicated region
        $region41: #{tpu_custom_call.1} parent=39 // pred_check
          %p206 = pneg %p90
        $region42: #{tpu_custom_call.1} parent=39 // pred_check_branch
          %208 = sbr.rel (%p206) target = $region44
        $region43: #{tpu_custom_call.1} parent=39 // pred_region
          %s209 = sand.u32 %s75, 1
          %s210 = scalar_lea.sflag [#allocation4], %s209
          %s211 = sand.u32 %s75, 1
          %s212 = smul.addr %s211, 8
          %s213 = scalar_lea.vmem [#allocation5], %s212
          %214 = dma.done %s210, 128
        $region44: #{tpu_custom_call.1} parent=39 // pred_fallthru
          _
      $region40: #{tpu_custom_call.1} parent=5 // pred_fallthru
        _
    $region6: #{tpu_custom_call.1} parent=1 // loop_footer
      %s18 = sadd.s32 1, %s14
    $region7: #{tpu_custom_call.1} parent=1 // loop_footer_branch
      %13 = sbr.rel target = $region3
    $region8: #{tpu_custom_call.1} parent=1 // loop_exit
      _
    %215 = vsyncpa [#allocation3], 1
    %s216 = scalar_lea.sflag [#allocation3], 1
    %217 = vsyncpa %s216, 1
    %218 = vsyncpa [#allocation4], 1
    %s219 = scalar_lea.sflag [#allocation4], 1
    %220 = vsyncpa %s219, 1

</llo_original>
